<compile_context>
chip_gen: v7x
topology: tpu7x:2x2x1
jax: 0.10.0
libtpu: 0.0.40
codegen_flags: <defaults>
</compile_context>

<pallas_src>
import jax
import jax.numpy as jnp
from jax.experimental import pallas as pl
from jax.experimental.pallas import tpu as pltpu


def _round_up(x, m):
    return ((x + m - 1) // m) * m


# ----------------------------- Pallas kernel ------------------------------- #
def _fused_linear_kernel(x_ref, w_ref, b_ref, o_ref):
    # One row tile of  y = x @ W + b.
    # x / W are bf16 (MXU native), accumulation is f32, bias added in f32 so the
    # epilogue is a single unmasked 128-lane-wide store.
    acc = jnp.dot(x_ref[...], w_ref[...], preferred_element_type=jnp.float32)
    o_ref[...] = (acc + b_ref[...]).astype(o_ref.dtype)


def fused_linear(x, w, b, *, tm_target=256):
    """y = x @ w + b on the MXU, bf16 operands / f32 accumulation.

    x : (M, K)   float32 (cast to bf16 for the MXU)
    w : (K, OUT) float32 (cast to bf16); OUT must be a multiple of 128 so the
                  output store is lane-dense (no masked vst.msk).
    b : (OUT,)   float32 (added in f32)
    """
    M, K = x.shape
    K2, OUT = w.shape
    assert K == K2
    assert OUT % 128 == 0, "pad OUT to a multiple of 128 for lane-dense stores"

    # Row tiling: one big tile when the problem is tiny (per-grid-step overhead
    # ~0.35us dominates otherwise); tm_target-row tiles for real sizes, which
    # keeps >=2 'parallel' grid steps (v7x megacore) while staying far below
    # the VMEM budget (2x-buffered bf16 (tm, K) input + f32 (tm, OUT) output).
    M_pad = _round_up(M, 16)          # multiple of 16: bf16 sublane packing
    if M_pad <= tm_target:
        tm = M_pad
    else:
        tm = tm_target
        M_pad = _round_up(M, tm)
    if M_pad != M:
        x = jnp.pad(x, ((0, M_pad - M), (0, 0)))   # zero rows; sliced off below

    xb = x.astype(jnp.bfloat16)
    wb = w.astype(jnp.bfloat16)
    b2 = b.reshape(1, OUT).astype(jnp.float32)

    y = pl.pallas_call(
        _fused_linear_kernel,
        out_shape=jax.ShapeDtypeStruct((M_pad, OUT), jnp.float32),
        grid=(M_pad // tm,),
        in_specs=[
            pl.BlockSpec((tm, K), lambda i: (i, 0)),    # row tile of x
            pl.BlockSpec((K, OUT), lambda i: (0, 0)),   # weight, resident (constant index map -> one DMA)
            pl.BlockSpec((1, OUT), lambda i: (0, 0)),   # bias, resident
        ],
        out_specs=pl.BlockSpec((tm, OUT), lambda i: (i, 0)),
        compiler_params=pltpu.CompilerParams(
            dimension_semantics=("parallel",)),
    )(xb, wb, b2)
    return y[:M]


# --------------------------- RelEncoder forward ----------------------------- #
def rel_encoder_forward(params, node_ids, lengths, index, src_enc):
    """Mirrors RelEncoder.forward (eval mode: Dropout / data_dropout identity).

    node_ids : (B*N, 2) int32   packed amr node ids, cols = [AMR_CAT, AMR_LE]
    lengths  : list[int]        per-example node counts (uniform == N here)
    index    : (B, N)  int32    alignment of each amr node to a source position
    src_enc  : (B, N, S, H)     per-node encoder states (double-unpacked src_enc)
    """
    AMR_CAT, AMR_LE = 0, 1
    B, N, S, H = src_enc.shape
    R = params["head_b"].shape[0]                       # opt.rel_dim

    # --- embeddings (XLA glue) ---
    cat_embed = jnp.take(params["cat_lut"], node_ids[:, AMR_CAT], axis=0)
    lemma_embed = jnp.take(params["lemma_lut"], node_ids[:, AMR_LE], axis=0)
    amr_emb = jnp.concatenate([cat_embed, lemma_embed], axis=1)      # (B*N, D_amr)
    D_amr = amr_emb.shape[-1]
    K = D_amr + H

    # --- getEmb head gather (XLA glue): head_emb_t[b,j] = src_enc[b,j,index[b,j]] ---
    head_emb_t = jnp.take_along_axis(
        src_enc, index[:, :, None, None], axis=2)[:, :, 0, :].reshape(B * N, H)

    # --- fused input rows ---
    # segment 1 (B*N rows):   [amr_emb | head_emb_t]   -> head + dep_amr outputs
    # segment 2 (B*N*S rows): [0       | src_enc]      -> dep_enc projection
    M1 = B * N
    M2 = B * N * S
    x1 = jnp.concatenate([amr_emb, head_emb_t], axis=1)                           # (M1, K)
    x2 = jnp.concatenate(
        [jnp.zeros((M2, D_amr), src_enc.dtype), src_enc.reshape(M2, H)], axis=1)  # (M2, K)
    x_fused = jnp.concatenate([x1, x2], axis=0)                                   # (M1+M2, K)

    # --- fused weight: 128-wide output column blocks [head | dep_amr | dep_enc | pad] ---
    head_Wt = params["head_W"].T                        # (K, R)   nn.Linear weight is (out, in)
    dep_Wt = params["dep_W"].T                          # (K, R)
    col_head = head_Wt
    col_dep_amr = jnp.concatenate(
        [dep_Wt[:D_amr], jnp.zeros((H, R), dep_Wt.dtype)], axis=0)      # only sees amr_emb
    col_dep_enc = jnp.concatenate(
        [jnp.zeros((D_amr, R), dep_Wt.dtype), dep_Wt[D_amr:]], axis=0)  # only sees encoder states
    OUT_PAD = _round_up(3 * R, 128)
    w_fused = jnp.concatenate(
        [col_head, col_dep_amr, col_dep_enc,
         jnp.zeros((K, OUT_PAD - 3 * R), head_Wt.dtype)], axis=1)       # (K, OUT_PAD)
    b_fused = jnp.concatenate(
        [params["head_b"], params["dep_b"],
         jnp.zeros((OUT_PAD - 2 * R,), params["head_b"].dtype)])        # dep bias folded into amr part

    # --- Pallas hot path: ONE MXU call for all three projections ---
    y = fused_linear(x_fused, w_fused, b_fused, tm_target=256)          # (M1+M2, OUT_PAD)

    head_out = y[:M1, 0:R]                                              # (B*N, R)
    dep_amr = y[:M1, R:2 * R]                                           # (B*N, R), incl. dep bias
    src_proj = y[M1:M1 + M2, 2 * R:3 * R].reshape(B, N, S, R)           # src_enc @ W_dep_enc

    # --- dep combine (XLA glue; gather on the *projected* states, O(B*N*N*R)) ---
    # enc_part[b, i, j] = src_proj[b, i, index[b, j]]
    enc_part = jnp.take_along_axis(src_proj, index[:, None, :, None], axis=2)   # (B, N, N, R)
    dep_out = (dep_amr.reshape(B, 1, N, R) + enc_part).reshape(B * N, N, R)
    # TODO(synk): for very large N this gather+add epilogue could itself be a
    # Pallas kernel with `index` scalar-prefetched; it is memory-bound glue only.

    length_pairs = [[l, l] for l in lengths]
    head_amr_packed = (amr_emb, lengths)        # MyPackedSequence(amr_emb, lengths)
    head_packed = (head_out, lengths)           # MyPackedSequence(head(head_emb), lengths)
    dep_packed = (dep_out, length_pairs)        # MyDoublePackedSequence(dep, length_pairs)
    # TODO(synk): ragged MyPackedSequence / MyDoublePackedSequence packing is
    # host-side bookkeeping; represented here as dense uniform-length tensors.
    return head_amr_packed, head_packed, dep_packed


# ----------------------------------- main ----------------------------------- #
if __name__ == "__main__":
    # small shapes consistent with the module
    B, N, S = 2, 8, 8                      # batch, amr nodes per example, src length
    CAT_DIM, LEMMA_DIM = 16, 16            # cat_lut / lemma_lut embedding dims
    REL_RNN, REL_DIM = 32, 32              # opt.rel_rnn_size, opt.rel_dim
    CAT_VOCAB, LEMMA_VOCAB = 20, 30
    IN = CAT_DIM + LEMMA_DIM + REL_RNN     # inputSize

    key = jax.random.PRNGKey(0)
    ks = jax.random.split(key, 10)

    params = {
        "cat_lut": 0.1 * jax.random.normal(ks[0], (CAT_VOCAB, CAT_DIM), jnp.float32),
        "lemma_lut": 0.1 * jax.random.normal(ks[1], (LEMMA_VOCAB, LEMMA_DIM), jnp.float32),
        "head_W": 0.1 * jax.random.normal(ks[2], (REL_DIM, IN), jnp.float32),  # nn.Linear: (out, in)
        "head_b": 0.1 * jax.random.normal(ks[3], (REL_DIM,), jnp.float32),
        "dep_W": 0.1 * jax.random.normal(ks[4], (REL_DIM, IN), jnp.float32),
        "dep_b": 0.1 * jax.random.normal(ks[5], (REL_DIM,), jnp.float32),
    }

    node_ids = jnp.stack(
        [jax.random.randint(ks[6], (B * N,), 0, CAT_VOCAB),
         jax.random.randint(ks[7], (B * N,), 0, LEMMA_VOCAB)], axis=1
    ).astype(jnp.int32)                                                  # (B*N, 2)
    lengths = [N] * B
    index = jax.random.randint(ks[8], (B, N), 0, S).astype(jnp.int32)    # (B, N)
    src_enc = jax.random.normal(ks[9], (B, N, S, REL_RNN), jnp.float32)  # (B, N, S, H_rnn)

    head_amr_packed, head_packed, dep_packed = rel_encoder_forward(
        params, node_ids, lengths, index, src_enc)
    amr_emb, _ = head_amr_packed
    head_out, _ = head_packed
    dep_out, _ = dep_packed
    jax.block_until_ready((amr_emb, head_out, dep_out))

    # ---- correctness: both branches vs. the module's math (bf16 operand precision) ----
    def bf(v):   # MXU operands are bf16; accumulation stays f32
        return v.astype(jnp.bfloat16).astype(jnp.float32)

    cat_e = jnp.take(params["cat_lut"], node_ids[:, 0], axis=0)
    lem_e = jnp.take(params["lemma_lut"], node_ids[:, 1], axis=0)
    amr_ref = jnp.concatenate([cat_e, lem_e], axis=1)
    head_emb_ref = jnp.take_along_axis(
        src_enc, index[:, :, None, None], axis=2)[:, :, 0, :].reshape(B * N, REL_RNN)
    head_in_ref = jnp.concatenate([amr_ref, head_emb_ref], axis=1)
    head_ref = bf(head_in_ref) @ bf(params["head_W"].T) + params["head_b"]
    assert jnp.allclose(head_out, head_ref, atol=1e-3, rtol=1e-3), "head linear mismatch"

    # dep reference built the naive (PyTorch) way: dep_in[b,i,j] = [amr[b,j] | enc[b,i,index[b,j]]]
    dep_emb_ref = jnp.take_along_axis(src_enc, index[:, None, :, None], axis=2)       # (B,N,N,H)
    dep_amr_ref = jnp.broadcast_to(
        amr_ref.reshape(B, N, -1)[:, None, :, :], (B, N, N, amr_ref.shape[-1]))
    dep_in_ref = jnp.concatenate([dep_amr_ref, dep_emb_ref], axis=-1).reshape(-1, IN)
    dep_ref = (bf(dep_in_ref) @ bf(params["dep_W"].T)
               + params["dep_b"]).reshape(B * N, N, REL_DIM)
    assert jnp.allclose(dep_out, dep_ref, atol=1e-3, rtol=1e-3), "dep linear mismatch"

    assert head_out.shape == (B * N, REL_DIM)
    assert dep_out.shape == (B * N, N, REL_DIM)
    assert amr_emb.shape == (B * N, CAT_DIM + LEMMA_DIM)

    print("KERNEL_OK")
</pallas_src>

<mosaic_0001>
module attributes {stable_mosaic.version = 11 : i64} {
  func.func @_fused_linear_kernel(%arg0: i32, %arg1: memref<144x64xbf16, #tpu.memory_space<vmem>>, %arg2: memref<64x128xbf16, #tpu.memory_space<vmem>>, %arg3: memref<1x128xf32, #tpu.memory_space<vmem>>, %arg4: memref<144x128xf32, #tpu.memory_space<vmem>>) attributes {dimension_semantics = [#tpu.dimension_semantics<parallel>], iteration_bounds = array<i64: 1>, scalar_prefetch = 0 : i64, scratch_operands = 0 : i64, tpu.core_type = #tpu.core_type<tc>, window_params = [{transform_indices = @transform_0, window_bounds = array<i64: 144, 64>}, {pipeline_mode = #tpu.pipeline_mode<synchronous>, transform_indices = @transform_1, window_bounds = array<i64: 64, 128>}, {pipeline_mode = #tpu.pipeline_mode<synchronous>, transform_indices = @transform_2, window_bounds = array<i64: 1, 128>}, {transform_indices = @transform_3, window_bounds = array<i64: 144, 128>}]} {
    %c0 = arith.constant 0 : index
    %c0_0 = arith.constant 0 : index
    %0 = vector.load %arg1[%c0, %c0_0] : memref<144x64xbf16, #tpu.memory_space<vmem>>, vector<144x64xbf16>
    %c0_1 = arith.constant 0 : index
    %c0_2 = arith.constant 0 : index
    %1 = vector.load %arg2[%c0_1, %c0_2] : memref<64x128xbf16, #tpu.memory_space<vmem>>, vector<64x128xbf16>
    %cst = arith.constant dense<0.000000e+00> : vector<144x128xf32>
    %2 = tpu.matmul %0, %1, %cst {dimension_numbers = #tpu.dot_dimension_numbers<[1], [0], [0], [1], [0, 0, 1, 1], [], []>} : vector<144x64xbf16>, vector<64x128xbf16>, vector<144x128xf32> -> vector<144x128xf32>
    %c0_3 = arith.constant 0 : index
    %c0_4 = arith.constant 0 : index
    %3 = vector.load %arg3[%c0_3, %c0_4] : memref<1x128xf32, #tpu.memory_space<vmem>>, vector<1x128xf32>
    %4 = vector.broadcast %3 : vector<1x128xf32> to vector<144x128xf32>
    %5 = arith.addf %2, %4 : vector<144x128xf32>
    %c0_5 = arith.constant 0 : index
    %c0_6 = arith.constant 0 : index
    %6 = vector.load %arg4[%c0_5, %c0_6] : memref<144x128xf32, #tpu.memory_space<vmem>>, vector<144x128xf32>
    tpu.vector_store %arg4[%c0_5, %c0_6], %5 {strides = array<i32>} : memref<144x128xf32, #tpu.memory_space<vmem>>, vector<144x128xf32>,
    return
  }
  func.func @transform_0(%arg0: i32) -> (i32, i32) {
    %c0_i32 = arith.constant 0 : i32
    %c0_i32_0 = arith.constant 0 : i32
    return %arg0, %c0_i32 : i32, i32
  }
  func.func @transform_1(%arg0: i32) -> (i32, i32) {
    %c0_i32 = arith.constant 0 : i32
    %c0_i32_0 = arith.constant 0 : i32
    %c0_i32_1 = arith.constant 0 : i32
    return %c0_i32, %c0_i32_0 : i32, i32
  }
  func.func @transform_2(%arg0: i32) -> (i32, i32) {
    %c0_i32 = arith.constant 0 : i32
    %c0_i32_0 = arith.constant 0 : i32
    %c0_i32_1 = arith.constant 0 : i32
    return %c0_i32, %c0_i32_0 : i32, i32
  }
  func.func @transform_3(%arg0: i32) -> (i32, i32) {
    %c0_i32 = arith.constant 0 : i32
    %c0_i32_0 = arith.constant 0 : i32
    return %arg0, %c0_i32 : i32, i32
  }
}

</mosaic_0001>

<llo_original>
// kernel: tpu_custom_call.1
$region0: #{tpu_custom_call.1}
  #allocation0 [shape = 'u32[]', space=smem, size = 0x4, offset = 0x4, fixed_abs, tag = 'smem constant byte address 0x4 - core index']
  #allocation1 [shape = 'u32[144,128]{1,0:T(1,128)}', space=vmem, size = 0x12000, scoped, tag = 'internal scratch']
  %s0 = inlined_call_operand.vmem [shape: bf16[144,64], index: 0, kind: input, shape index: {}]
  %s1 = inlined_call_operand.vmem [shape: bf16[64,128], index: 1, kind: input, shape index: {}]
  %s2 = inlined_call_operand.vmem [shape: f32[1,128], index: 2, kind: input, shape index: {}]
  %s3 = inlined_call_operand.hbm [shape: f32[144,128], index: 3, kind: output, shape index: {}]
  %s4 = sld [smem:[#allocation0]]
  $region22: #{tpu_custom_call.1} parent=0
    _
  %s6 = ssub.s32 1, %s4
  %s7 = scalar_select 0, %s6, %s4
  $region1: #{tpu_custom_call.1} parent=0
    #allocation2 [shape = 'u8[73728]{0}', space=vmem, size = 0x12000, scoped, tag = 'output window, operand 0, single buffered']
    #allocation3 [shape = 's32[1]{0}', space=sflag, size = 0x4, scoped, tag = 'scoped memory for tpu_custom_call.1']
    %8 = vsyncpa [#allocation3], 0
    // Predicated region
    $region2: #{tpu_custom_call.1} parent=1 // pred_check
      _
    $region3: #{tpu_custom_call.1} parent=1 // pred_check_branch
      %10 = sbr.rel (0) target = $region5
    $region4: #{tpu_custom_call.1} parent=1 // pred_region
      _
    $region5: #{tpu_custom_call.1} parent=1 // pred_fallthru
      _
    // Predicated region
    $region6: #{tpu_custom_call.1} parent=1 // pred_check
      _
    $region7: #{tpu_custom_call.1} parent=1 // pred_check_branch
      %12 = sbr.rel (0) target = $region9
    $region8: #{tpu_custom_call.1} parent=1 // pred_region
      _
    $region9: #{tpu_custom_call.1} parent=1 // pred_fallthru
      _
    // Predicated region
    $region10: #{tpu_custom_call.1} parent=1 // pred_check
      _
    $region11: #{tpu_custom_call.1} parent=1 // pred_check_branch
      %14 = sbr.rel (0) target = $region13
    $region12: #{tpu_custom_call.1} parent=1 // pred_region
      _
    $region13: #{tpu_custom_call.1} parent=1 // pred_fallthru
      _
    %v16 = vld [vmem:[%s0] sm:$0xf]
    %v17 = vld [vmem:[%s0 + $0x4] sm:$0xf]
    %v18 = vld [vmem:[%s0 + $0x8] sm:$0xf]
    %v19 = vld [vmem:[%s0 + $0xc] sm:$0xf]
    %v20 = vld [vmem:[%s0 + $0x10] sm:$0xf]
    %v21 = vld [vmem:[%s0 + $0x14] sm:$0xf]
    %v22 = vld [vmem:[%s0 + $0x18] sm:$0xf]
    %v23 = vld [vmem:[%s0 + $0x1c] sm:$0xf]
    %v24 = vld [vmem:[%s0 + $0x20] sm:$0xf]
    %v25 = vld [vmem:[%s0 + $0x24] sm:$0xf]
    %v26 = vld [vmem:[%s0 + $0x28] sm:$0xf]
    %v27 = vld [vmem:[%s0 + $0x2c] sm:$0xf]
    %v28 = vld [vmem:[%s0 + $0x30] sm:$0xf]
    %v29 = vld [vmem:[%s0 + $0x34] sm:$0xf]
    %v30 = vld [vmem:[%s0 + $0x38] sm:$0xf]
    %v31 = vld [vmem:[%s0 + $0x3c] sm:$0xf]
    %v32 = vld [vmem:[%s0 + $0x40] sm:$0xf]
    %v33 = vld [vmem:[%s0 + $0x44] sm:$0xf]
    %v34 = vld [vmem:[%s1] sm:$0xf]
    %v35 = vld [vmem:[%s1 + $0x4] sm:$0xf]
    %v36 = vld [vmem:[%s1 + $0x8] sm:$0xf]
    %v37 = vld [vmem:[%s1 + $0xc] sm:$0xf]
    %v38 = vld [vmem:[%s1 + $0x10] sm:$0xf]
    %v39 = vld [vmem:[%s1 + $0x14] sm:$0xf]
    %v40 = vld [vmem:[%s1 + $0x18] sm:$0xf]
    %v41 = vld [vmem:[%s1 + $0x1c] sm:$0xf]
    %v42 = vld [vmem:[%s2] sm:$0x1]
    %v44 = vlaneseq
    %v45 = vshrl.u32 %v44, 7
    %v46 = vsub.s32 0, %v45
    %v47 = vrot.slane %v42, %v46
    %v67 = vunpack.c.l.b16 %v16
    %v68 = vunpack.c.l.b16 %v17
    %v69 = vunpack.c.l.b16 %v18
    %v70 = vunpack.c.l.b16 %v19
    %v71 = vunpack.c.l.b16 %v20
    %v72 = vunpack.c.l.b16 %v21
    %v73 = vunpack.c.l.b16 %v22
    %v74 = vunpack.c.l.b16 %v23
    %v75 = vunpack.c.l.b16 %v24
    %v76 = vunpack.c.l.b16 %v25
    %v77 = vunpack.c.l.b16 %v26
    %v78 = vunpack.c.l.b16 %v27
    %v79 = vunpack.c.l.b16 %v28
    %v80 = vunpack.c.l.b16 %v29
    %v81 = vunpack.c.l.b16 %v30
    %v82 = vunpack.c.l.b16 %v31
    %v83 = vunpack.c.l.b16 %v32
    %v84 = vunpack.c.l.b16 %v33
    %v85 = vpack.c.b16 %v68, %v67
    %v86 = vpack.c.b16 %v70, %v69
    %v87 = vpack.c.b16 %v72, %v71
    %v88 = vpack.c.b16 %v74, %v73
    %v89 = vpack.c.b16 %v76, %v75
    %v90 = vpack.c.b16 %v78, %v77
    %v91 = vpack.c.b16 %v80, %v79
    %v92 = vpack.c.b16 %v82, %v81
    %v93 = vpack.c.b16 %v84, %v83
    %v102 = vunpack.c.l.b16 %v34
    %v103 = vunpack.c.l.b16 %v35
    %v104 = vunpack.c.l.b16 %v36
    %v105 = vunpack.c.l.b16 %v37
    %v106 = vunpack.c.l.b16 %v38
    %v107 = vunpack.c.l.b16 %v39
    %v108 = vunpack.c.l.b16 %v40
    %v109 = vunpack.c.l.b16 %v41
    %v110 = vpack.c.b16 %v103, %v102
    %v111 = vpack.c.b16 %v105, %v104
    %v112 = vpack.c.b16 %v107, %v106
    %v113 = vpack.c.b16 %v109, %v108
    %vm118 = vcmask 523264
    %v120 = vsel %vm118, %v85, 0
    %v123 = vsel %vm118, %v86, 0
    %v126 = vsel %vm118, %v87, 0
    %v129 = vsel %vm118, %v88, 0
    %v132 = vsel %vm118, %v89, 0
    %v135 = vsel %vm118, %v90, 0
    %v138 = vsel %vm118, %v91, 0
    %v141 = vsel %vm118, %v92, 0
    %v144 = vsel %vm118, %v93, 0
    %146 = vmatprep.subr.bf16.mxu0 0
    %147 = vmatpush1.bf16.msra.mxu0 %v110
    %148 = vmatprep.subr.bf16.mxu0 0
    %149 = vmatpush1.bf16.msra.mxu0 %v111
    %150 = vmatprep.subr.bf16.mxu0 0
    %151 = vmatpush1.bf16.msra.mxu0 %v112
    %152 = vmatprep.subr.bf16.mxu0 0
    %153 = vmatpush1.bf16.msra.mxu0 %v113
    %154 = vmatprep.subr.bf16.mxu0 0
    %155 = vmatpush1.bf16.msra.mxu0 0
    %156 = vmatprep.subr.bf16.mxu0 0
    %157 = vmatpush1.bf16.msra.mxu0 0
    %158 = vmatprep.subr.bf16.mxu0 0
    %159 = vmatpush1.bf16.msra.mxu0 0
    %160 = vmatprep.subr.bf16.mxu0 0
    %161 = vmatpush1.bf16.msra.mxu0 0
    %162 = vmatprep.subr.bf16.mxu0 0
    %163 = vmatpush1.bf16.msra.mxu0 0
    %164 = vmatprep.subr.bf16.mxu0 0
    %165 = vmatpush1.bf16.msra.mxu0 0
    %166 = vmatprep.subr.bf16.mxu0 0
    %167 = vmatpush1.bf16.msra.mxu0 0
    %168 = vmatprep.subr.bf16.mxu0 0
    %169 = vmatpush1.bf16.msra.mxu0 0
    %170 = vmatprep.subr.bf16.mxu0 0
    %171 = vmatpush1.bf16.msra.mxu0 0
    %172 = vmatprep.subr.bf16.mxu0 0
    %173 = vmatpush1.bf16.msra.mxu0 0
    %174 = vmatprep.subr.bf16.mxu0 0
    %175 = vmatpush1.bf16.msra.mxu0 0
    %176 = vmatprep.subr.bf16.mxu0 0
    %177 = vmatpush1.bf16.msra.mxu0 0
    %178 = vmatprep.mubr.bf16.mxu0 0
    %179 = vmatmul.mubr.bf16.gmra.mrb[0].mxu0 %v120
    %v180 = vpop.f32.mrb[0].mxu0
    %v181 = vadd.f32 %v47, %v180
    %v182 = vpop.f32.mrb[0].mxu0
    %v183 = vpop.f32.mrb[0].mxu0
    %v184 = vadd.f32 %v47, %v183
    %v185 = vpop.f32.mrb[0].mxu0
    %186 = vmatprep.mubr.bf16.mxu0 0
    %187 = vmatmul.mubr.bf16.gmra.mrb[0].mxu0 %v123
    %v188 = vpop.f32.mrb[0].mxu0
    %v189 = vadd.f32 %v47, %v188
    %v190 = vpop.f32.mrb[0].mxu0
    %v191 = vpop.f32.mrb[0].mxu0
    %v192 = vadd.f32 %v47, %v191
    %v193 = vpop.f32.mrb[0].mxu0
    %194 = vmatprep.mubr.bf16.mxu0 0
    %195 = vmatmul.mubr.bf16.gmra.mrb[0].mxu0 %v126
    %v196 = vpop.f32.mrb[0].mxu0
    %v197 = vadd.f32 %v47, %v196
    %v198 = vpop.f32.mrb[0].mxu0
    %v199 = vpop.f32.mrb[0].mxu0
    %v200 = vadd.f32 %v47, %v199
    %v201 = vpop.f32.mrb[0].mxu0
    %202 = vmatprep.mubr.bf16.mxu0 0
    %203 = vmatmul.mubr.bf16.gmra.mrb[0].mxu0 %v129
    %v204 = vpop.f32.mrb[0].mxu0
    %v205 = vadd.f32 %v47, %v204
    %v206 = vpop.f32.mrb[0].mxu0
    %v207 = vpop.f32.mrb[0].mxu0
    %v208 = vadd.f32 %v47, %v207
    %v209 = vpop.f32.mrb[0].mxu0
    %210 = vmatprep.mubr.bf16.mxu0 0
    %211 = vmatmul.mubr.bf16.gmra.mrb[0].mxu0 %v132
    %v212 = vpop.f32.mrb[0].mxu0
    %v213 = vadd.f32 %v47, %v212
    %v214 = vpop.f32.mrb[0].mxu0
    %v215 = vpop.f32.mrb[0].mxu0
    %v216 = vadd.f32 %v47, %v215
    %v217 = vpop.f32.mrb[0].mxu0
    %218 = vmatprep.mubr.bf16.mxu0 0
    %219 = vmatmul.mubr.bf16.gmra.mrb[0].mxu0 %v135
    %v220 = vpop.f32.mrb[0].mxu0
    %v221 = vadd.f32 %v47, %v220
    %v222 = vpop.f32.mrb[0].mxu0
    %v223 = vpop.f32.mrb[0].mxu0
    %v224 = vadd.f32 %v47, %v223
    %v225 = vpop.f32.mrb[0].mxu0
    %226 = vmatprep.mubr.bf16.mxu0 0
    %227 = vmatmul.mubr.bf16.gmra.mrb[0].mxu0 %v138
    %v228 = vpop.f32.mrb[0].mxu0
    %v229 = vadd.f32 %v47, %v228
    %v230 = vpop.f32.mrb[0].mxu0
    %v231 = vpop.f32.mrb[0].mxu0
    %v232 = vadd.f32 %v47, %v231
    %v233 = vpop.f32.mrb[0].mxu0
    %234 = vmatprep.mubr.bf16.mxu0 0
    %235 = vmatmul.mubr.bf16.gmra.mrb[0].mxu0 %v141
    %v236 = vpop.f32.mrb[0].mxu0
    %v237 = vadd.f32 %v47, %v236
    %v238 = vpop.f32.mrb[0].mxu0
    %v239 = vpop.f32.mrb[0].mxu0
    %v240 = vadd.f32 %v47, %v239
    %v241 = vpop.f32.mrb[0].mxu0
    %242 = vmatprep.mubr.bf16.mxu0 0
    %243 = vmatmul.mubr.bf16.gmra.mrb[0].mxu0 %v144
    %v244 = vpop.f32.mrb[0].mxu0
    %v245 = vadd.f32 %v47, %v244
    %v246 = vpop.f32.mrb[0].mxu0
    %v247 = vpop.f32.mrb[0].mxu0
    %v248 = vadd.f32 %v47, %v247
    %v249 = vpop.f32.mrb[0].mxu0
    %250 = vdwg.mxu0
    %251 = vst [vmem:[#allocation2] sm:$0xff] %v181
    %252 = vst [vmem:[#allocation2 + $0x8] sm:$0xff] %v184
    %253 = vst [vmem:[#allocation2 + $0x10] sm:$0xff] %v189
    %254 = vst [vmem:[#allocation2 + $0x18] sm:$0xff] %v192
    %255 = vst [vmem:[#allocation2 + $0x20] sm:$0xff] %v197
    %256 = vst [vmem:[#allocation2 + $0x28] sm:$0xff] %v200
    %257 = vst [vmem:[#allocation2 + $0x30] sm:$0xff] %v205
    %258 = vst [vmem:[#allocation2 + $0x38] sm:$0xff] %v208
    %259 = vst [vmem:[#allocation2 + $0x40] sm:$0xff] %v213
    %260 = vst [vmem:[#allocation2 + $0x48] sm:$0xff] %v216
    %261 = vst [vmem:[#allocation2 + $0x50] sm:$0xff] %v221
    %262 = vst [vmem:[#allocation2 + $0x58] sm:$0xff] %v224
    %263 = vst [vmem:[#allocation2 + $0x60] sm:$0xff] %v229
    %264 = vst [vmem:[#allocation2 + $0x68] sm:$0xff] %v232
    %265 = vst [vmem:[#allocation2 + $0x70] sm:$0xff] %v237
    %266 = vst [vmem:[#allocation2 + $0x78] sm:$0xff] %v240
    %267 = vst [vmem:[#allocation2 + $0x80] sm:$0xff] %v245
    %268 = vst [vmem:[#allocation2 + $0x88] sm:$0xff] %v248
    // Predicated region
    $region14: #{tpu_custom_call.1} parent=1 // pred_check
      _
    $region15: #{tpu_custom_call.1} parent=1 // pred_check_branch
      %270 = sbr.rel (0) target = $region17
    $region16: #{tpu_custom_call.1} parent=1 // pred_region
      %s272 = ssub.s32 2304, 2304
      %273 = vsyncadd [#allocation3], %s272
      %s274 = sshll.u32 [#allocation2], 4
      %s275 = int_to_ptr.vmem [resolvable:$true] %s274
      %280 = dma.vmem_to_hbm [thread:$0]  %s275, 2304, %s3, [#allocation3], 128, 128, 8
    $region17: #{tpu_custom_call.1} parent=1 // pred_fallthru
      _
    // Predicated region
    $region18: #{tpu_custom_call.1} parent=1 // pred_check
      _
    $region19: #{tpu_custom_call.1} parent=1 // pred_check_branch
      %282 = sbr.rel (0) target = $region21
    $region20: #{tpu_custom_call.1} parent=1 // pred_region
      %283 = dma.done [#allocation3], 2304
    $region21: #{tpu_custom_call.1} parent=1 // pred_fallthru
      _
    %284 = vsyncpa [#allocation3], 1

</llo_original>
